<compile_context>
chip_gen: v6e
topology: v6e:2x2x1
jax: 0.10.0
libtpu: 0.0.40
codegen_flags: <defaults>
</compile_context>

<pallas_src>
import jax
import jax.numpy as jnp
from jax.experimental import pallas as pl
from jax.experimental.pallas import tpu as pltpu


def _resolve_out_shape(out_shape, total):
    """PyTorch-style shape resolution (supports a single -1 entry)."""
    out_shape = tuple(int(d) for d in out_shape)
    if out_shape.count(-1) > 1:
        raise ValueError("only one dimension can be inferred")
    known = 1
    for d in out_shape:
        if d != -1:
            known *= d
    if -1 in out_shape:
        if known == 0 or total % known != 0:
            raise ValueError(f"cannot reshape {total} elements into {out_shape}")
        out_shape = tuple(total // known if d == -1 else d for d in out_shape)
    elif known != total:
        raise ValueError(f"cannot reshape {total} elements into {out_shape}")
    return out_shape


def _dma_copy_kernel(x_ref, o_ref, sem):
    # Both refs live in HBM (memory_space=pl.ANY): issue one full-buffer DMA and wait.
    # No VMEM staging, no grid, no per-step overhead.
    cp = pltpu.make_async_copy(x_ref, o_ref, sem)
    cp.start()
    cp.wait()


def _pallas_materialize_copy(x):
    """Materialize `x` into a fresh buffer with a single HBM->HBM DMA."""
    nbytes = x.size * jnp.dtype(x.dtype).itemsize
    return pl.pallas_call(
        _dma_copy_kernel,
        out_shape=jax.ShapeDtypeStruct(x.shape, x.dtype),
        in_specs=[pl.BlockSpec(memory_space=pl.ANY)],
        out_specs=pl.BlockSpec(memory_space=pl.ANY),
        scratch_shapes=[pltpu.SemaphoreType.DMA],
        cost_estimate=pl.CostEstimate(
            flops=0, transcendentals=0, bytes_accessed=2 * nbytes
        ),
    )(x)


def reshape_forward(in_tensor, out_shape, materialize=False):
    """JAX/Pallas equivalent of Reshape.forward: in_tensor.reshape(*out_shape).

    materialize=False (default): metadata-only reshape (fastest; recommended).
    materialize=True: force the bytes through a Pallas kernel (single HBM->HBM DMA),
                      then attach the target shape with a free metadata reshape.
    """
    resolved = _resolve_out_shape(out_shape, in_tensor.size)
    if not materialize:
        # Reshape of a contiguous array is metadata-only in XLA: ~0 us, 0 HBM bytes.
        return jnp.reshape(in_tensor, resolved)
    out = _pallas_materialize_copy(in_tensor)   # the only data movement (1 DMA)
    return jnp.reshape(out, resolved)           # metadata-only


class Reshape:
    """Mirror of the PyTorch Reshape module."""

    def __init__(self, out_shape, materialize=False):
        self.out_shape = tuple(out_shape)
        self.materialize = materialize

    def __call__(self, in_tensor, **kwargs):
        return reshape_forward(in_tensor, self.out_shape, materialize=self.materialize)


if __name__ == "__main__":
    key = jax.random.PRNGKey(0)

    in_shape = (2, 4, 16, 16)          # small NCHW-like input
    out_shape = (2, -1, 16)            # PyTorch-style -1 inference -> (2, 64, 16)

    x = jax.random.normal(key, in_shape, dtype=jnp.float32)
    ref = jnp.reshape(x, (2, 64, 16))

    # Default fast path: pure metadata reshape (no kernel, no HBM traffic).
    fast = jax.block_until_ready(Reshape(out_shape)(x))
    assert fast.shape == ref.shape, f"shape mismatch: {fast.shape} vs {ref.shape}"
    assert bool(jnp.array_equal(fast, ref)), "fast-path mismatch vs reference reshape"

    # Pallas path: run the HBM->HBM DMA kernel once and verify bit-exactness.
    out = jax.block_until_ready(Reshape(out_shape, materialize=True)(x))
    assert out.shape == ref.shape, f"shape mismatch: {out.shape} vs {ref.shape}"
    assert bool(jnp.array_equal(out, ref)), "kernel-path mismatch vs reference reshape"

    print("KERNEL_OK")
</pallas_src>

<mosaic_0001>
module attributes {stable_mosaic.version = 11 : i64} {
  func.func @_dma_copy_kernel(%arg0: memref<2x4x16x16xf32, #tpu.memory_space<any>>, %arg1: memref<2x4x16x16xf32, #tpu.memory_space<any>>, %arg2: memref<!tpu.dma_semaphore, #tpu.memory_space<semaphore_mem>>) attributes {dimension_semantics = [], scalar_prefetch = 0 : i64, scratch_operands = 1 : i64, tpu.core_type = #tpu.core_type<tc>} {
    tpu.enqueue_dma source(%arg0 : memref<2x4x16x16xf32, #tpu.memory_space<any>>) target(%arg1 : memref<2x4x16x16xf32, #tpu.memory_space<any>>) target_semaphore(%arg2 : memref<!tpu.dma_semaphore, #tpu.memory_space<semaphore_mem>>)
    tpu.wait_dma2 semaphore(%arg2 : memref<!tpu.dma_semaphore, #tpu.memory_space<semaphore_mem>>) src(%arg0 : memref<2x4x16x16xf32, #tpu.memory_space<any>>) dst(%arg1 : memref<2x4x16x16xf32, #tpu.memory_space<any>>)
    return
  }
}

</mosaic_0001>

<llo_original>
// kernel: tpu_custom_call.1
$region0: #{tpu_custom_call.1}
  #allocation0 [shape = 'u32[]', space=smem, size = 0x4, offset = 0x4, fixed_abs, tag = 'smem constant byte address 0x4 - core index']
  #allocation1 [shape = 'u32[144,128]{1,0:T(1,128)}', space=vmem, size = 0x12000, scoped, tag = 'internal scratch']
  #allocation2 [shape = 's32[1]{0}', space=sflag, size = 0x4, scoped, tag = 'scratch operand']
  #allocation3 [shape = 's32[]', space=sflag, size = 0x4, offset = 0, fixed_abs, tag = 'sflag constant byte address 0x0 - dummy sync flag']
  #allocation4 [shape = 'u32[0]{0}', space=smem, size = 0, offset = 0, fixed_abs, tag = 'smem constant byte address 0x0 - null']
  %s0 = inlined_call_operand.hbm [shape: f32[2,4,16,16], index: 0, kind: input, shape index: {}]
  %s1 = inlined_call_operand.hbm [shape: f32[2,4,16,16], index: 1, kind: output, shape index: {}]
  %s2 = sld [smem:[#allocation0]]
  $region2: #{tpu_custom_call.1} parent=0
    _
  %s4 = ssub.s32 1, %s2
  %s5 = scalar_select 0, %s4, %s2
  %s7 = sshll.u32 1, 14
  %s8 = sxor.u32 4294967295, %s7
  %12 = dma.general %s0, 2048, %s1, [#allocation2], 131072, [#allocation4], 0, 0
  %s13 = smul.u32 2, 4
  %s14 = smul.u32 %s13, 16
  %s15 = smul.u32 %s14, 1
  %s16 = sshll.u32 %s15, 4
  %17 = dma.done [#allocation2], %s16
  %18 = vsyncmov [#allocation2]
  %s19 = vpop.sfrf %18
  %p20 = scmp.eq.s32.totalorder %s19, 0
  %p21 = pneg %p20
  %23 = shalt.err (%p21)

</llo_original>
